<compile_context>
chip_gen: v7x
topology: tpu7x:2x2x1
jax: 0.10.0
libtpu: 0.0.40
codegen_flags: <defaults>
</compile_context>

<pallas_src>
import jax
import jax.numpy as jnp
from jax.experimental import pallas as pl
from jax.experimental.pallas import tpu as pltpu

HIDDEN = (64, 64)


def _residual_mlp_kernel(alpha_ref,                 # SMEM (1,1) PReLU slope
                         x_ref,                     # (TB, 2D)   f32   row j = [x[2j] | x[2j+1]]
                         w_in_ref, b1_ref,          # (2D, 256) bf16, (1, 128) f32
                         w2_ref, b2_ref,            # (128, 128) bf16, (1, 128) f32
                         w3_ref, b_out_ref,         # (128, 128) bf16, (1, 128) f32 (b3+br)
                         o_ref):                    # (TB, 128)  f32   row j = [out[2j] | out[2j+1]]
    a = alpha_ref[0, 0]

    # In-kernel f32 -> bf16 cast (rides idle VPU slots; avoids a separate wrapper pass
    # over x and halves the x HBM read vs shipping a pre-cast copy).
    x = x_ref[...].astype(jnp.bfloat16)

    # Fused [fc1_even | fc1_odd | res_even | res_odd]: one lane-full (2D,256) MXU matmul.
    y = jnp.dot(x, w_in_ref[...], preferred_element_type=jnp.float32)        # (TB, 256) f32

    h1 = y[:, :128] + b1_ref[...]                   # [fc1_e | fc1_o] pre-activation (f32)
    h1 = jnp.where(h1 > 0, h1, a * h1)              # PReLU on full 128-lane vregs (VPU)
    res = y[:, 128:]                                # [res_e | res_o] (bias folded into b_out)

    # fc2 + PReLU (block-diagonal weight keeps the two row-streams independent).
    h2 = jnp.dot(h1.astype(jnp.bfloat16), w2_ref[...],
                 preferred_element_type=jnp.float32) + b2_ref[...]
    h2 = jnp.where(h2 > 0, h2, a * h2)

    # dropout(p=0.5) — identity at inference.
    # TODO(synk): training-mode dropout (pltpu.prng_seed / prng_random_bits masking).

    # fc3 broadcast to 64 lanes per stream via pre-tiled block-diagonal weight.
    out3 = jnp.dot(h2.astype(jnp.bfloat16), w3_ref[...],
                   preferred_element_type=jnp.float32)                       # (TB, 128)

    # out = fc3(h2) + residual(x) + (b3 + br) — lane-dense (·,128) store.
    o_ref[...] = out3 + res + b_out_ref[...]


def pack_params(params):
    """One-time weight packing, hoisted out of the per-call path (pure layout/precompute)."""
    H0, H1 = HIDDEN
    w1 = params["w1"].astype(jnp.float32)
    wr = params["wr"].astype(jnp.float32)
    w2 = params["w2"].astype(jnp.float32)
    w3 = params["w3"].astype(jnp.float32)
    D = w1.shape[0]

    zD = jnp.zeros((D, H0), jnp.float32)
    zH = jnp.zeros((H0, H1), jnp.float32)

    # (2D, 256): columns = [fc1_even | fc1_odd | res_even | res_odd]
    w_in = jnp.concatenate([
        jnp.concatenate([w1, zD], axis=0),
        jnp.concatenate([zD, w1], axis=0),
        jnp.concatenate([wr, zD], axis=0),
        jnp.concatenate([zD, wr], axis=0)], axis=1).astype(jnp.bfloat16)

    w2_bd = jnp.concatenate([
        jnp.concatenate([w2, zH], axis=0),
        jnp.concatenate([zH, w2], axis=0)], axis=1).astype(jnp.bfloat16)      # (128, 128)

    w3t = jnp.tile(w3, (1, H1))                                               # (64, 64) broadcasts fc3
    w3_bd = jnp.concatenate([
        jnp.concatenate([w3t, zH], axis=0),
        jnp.concatenate([zH, w3t], axis=0)], axis=1).astype(jnp.bfloat16)     # (128, 128)

    b1 = jnp.tile(params["b1"].astype(jnp.float32), (1, 2))                   # (1, 128)
    b2 = jnp.tile(params["b2"].astype(jnp.float32), (1, 2))                   # (1, 128)
    b_out = jnp.tile((params["br"] + params["b3"]).astype(jnp.float32), (1, 2))  # (1, 128)
    alpha = params["alpha"].reshape(1, 1).astype(jnp.float32)

    return {"w_in": w_in, "b1": b1, "w2": w2_bd, "b2": b2,
            "w3": w3_bd, "b_out": b_out, "alpha": alpha, "input_dim": D}


def _pick_tile(rows, d, vmem_budget_bytes):
    """Row-pairs per grid step, sized for ~4 MiB HBM traffic/step within the VMEM budget."""
    if rows <= 8:
        return rows
    hbm_per_row = 8 * d + 512               # f32 x row (2d lanes) + f32 out row (128 lanes)
    vmem_per_row = 2 * hbm_per_row          # double-buffered by the Pallas pipeline
    cap_traffic = (4 << 20) // hbm_per_row  # amortize the ~0.35 us per-step overhead
    cap_vmem = vmem_budget_bytes // vmem_per_row
    cap_grid = -(-rows // 4)                # keep >=4 grid steps when possible (v7x megacore)
    tb = min(cap_traffic, cap_vmem, cap_grid, rows)
    return max(8, (tb // 8) * 8)


def simple_residual_network(x, packed, *, vmem_budget_bytes=32 << 20):
    """x: (B, D) float32; packed: output of pack_params. Returns (B, 64) float32."""
    B, D = x.shape
    H0, H1 = HIDDEN
    assert D == packed["input_dim"]

    # Pack rows into pairs so intermediates and the output store are lane-dense (128 wide).
    Bw = B
    if B % 2:
        x = jnp.pad(x, ((0, 1), (0, 0)))    # single extra row only when B is odd
        Bw = B + 1
    B2 = Bw // 2
    x2 = x.reshape(B2, 2 * D)               # free, contiguity-preserving reshape

    tb = _pick_tile(B2, D, vmem_budget_bytes)
    grid = (pl.cdiv(B2, tb),)               # partial last block: OOB rows are store-masked

    const = lambda shape: pl.BlockSpec(shape, lambda i: (0, 0))   # VMEM-resident across tiles

    out2 = pl.pallas_call(
        _residual_mlp_kernel,
        out_shape=jax.ShapeDtypeStruct((B2, 2 * H1), jnp.float32),
        grid=grid,
        in_specs=[
            pl.BlockSpec(memory_space=pltpu.MemorySpace.SMEM),    # alpha (scalar)
            pl.BlockSpec((tb, 2 * D), lambda i: (i, 0)),          # x tile (f32; cast in-kernel)
            const((2 * D, 4 * H0)), const((1, 2 * H0)),           # fused block-diag fc1|res, b1
            const((2 * H0, 2 * H1)), const((1, 2 * H1)),          # block-diag fc2, b2
            const((2 * H1, 2 * H1)), const((1, 2 * H1)),          # block-diag tiled fc3, b3+br
        ],
        out_specs=pl.BlockSpec((tb, 2 * H1), lambda i: (i, 0)),
        compiler_params=pltpu.CompilerParams(
            dimension_semantics=("parallel",),                    # batch tiles across TCs (v7x)
            vmem_limit_bytes=48 * 1024 * 1024),                   # headroom under v7x's 64 MiB
    )(packed["alpha"], x2, packed["w_in"], packed["b1"],
      packed["w2"], packed["b2"], packed["w3"], packed["b_out"])

    out = out2.reshape(Bw, H1)              # free reshape back to per-row (B, 64) layout
    return out if Bw == B else out[:B]


def init_params(key, input_dim):
    """Deterministic init mimicking PyTorch Linear defaults (uniform +-1/sqrt(fan_in))."""
    H0, H1 = HIDDEN
    ks = jax.random.split(key, 8)

    def linear(kw, kb, fan_in, fan_out):
        bound = 1.0 / jnp.sqrt(fan_in)
        w = jax.random.uniform(kw, (fan_in, fan_out), jnp.float32, -bound, bound)  # (in, out)
        b = jax.random.uniform(kb, (1, fan_out), jnp.float32, -bound, bound)
        return w, b

    w1, b1 = linear(ks[0], ks[1], input_dim, H0)
    w2, b2 = linear(ks[2], ks[3], H0, H1)
    w3, b3 = linear(ks[4], ks[5], H1, 1)
    wr, br = linear(ks[6], ks[7], input_dim, H1)
    return {
        "w1": w1, "b1": b1,
        "w2": w2, "b2": b2,
        "w3": w3, "b3": b3,
        "wr": wr, "br": br,
        "alpha": jnp.array([0.25], dtype=jnp.float32),   # PReLU default init
    }


def reference_forward(x, params):
    """Pure f32 JAX reference matching the PyTorch forward (incl. the (B,1)+(B,64) broadcast)."""
    a = params["alpha"][0]
    prelu = lambda v: jnp.where(v > 0, v, a * v)
    h1 = prelu(x @ params["w1"] + params["b1"])
    h2 = prelu(h1 @ params["w2"] + params["b2"])
    return (h2 @ params["w3"] + params["b3"]) + (x @ params["wr"] + params["br"])


if __name__ == "__main__":
    key = jax.random.PRNGKey(0)
    k_params, k_x1, k_x2 = jax.random.split(key, 3)

    D = 32
    params = init_params(k_params, D)
    packed = pack_params(params)      # weight packing hoisted out of the per-call path

    # Small even batch: single full tile.
    x = jax.random.normal(k_x1, (8, D), dtype=jnp.float32)
    out = jax.block_until_ready(simple_residual_network(x, packed))
    ref = reference_forward(x, params)
    assert out.shape == (8, HIDDEN[1]), out.shape
    # bf16 MXU operands (f32 accumulate) -> loosened tolerance vs the f32 reference.
    assert jnp.allclose(out, ref, atol=3e-2, rtol=3e-2), "mismatch vs reference (B=8)"

    # Odd batch that is not a multiple of the tile: exercises the single-row pad and the
    # store-masked partial last grid block (B=29 -> 15 row-pairs, tb=8, grid=2).
    x_odd = jax.random.normal(k_x2, (29, D), dtype=jnp.float32)
    out_odd = jax.block_until_ready(simple_residual_network(x_odd, packed))
    ref_odd = reference_forward(x_odd, params)
    assert out_odd.shape == (29, HIDDEN[1]), out_odd.shape
    assert jnp.allclose(out_odd, ref_odd, atol=3e-2, rtol=3e-2), "mismatch vs reference (B=29)"

    print("KERNEL_OK")
</pallas_src>

<mosaic_0001>
module attributes {stable_mosaic.version = 11 : i64} {
  func.func @_residual_mlp_kernel(%arg0: i32, %arg1: memref<1x1xf32, #tpu.memory_space<smem>>, %arg2: memref<4x64xf32, #tpu.memory_space<vmem>>, %arg3: memref<64x256xbf16, #tpu.memory_space<vmem>>, %arg4: memref<1x128xf32, #tpu.memory_space<vmem>>, %arg5: memref<128x128xbf16, #tpu.memory_space<vmem>>, %arg6: memref<1x128xf32, #tpu.memory_space<vmem>>, %arg7: memref<128x128xbf16, #tpu.memory_space<vmem>>, %arg8: memref<1x128xf32, #tpu.memory_space<vmem>>, %arg9: memref<4x128xf32, #tpu.memory_space<vmem>>) attributes {dimension_semantics = [#tpu.dimension_semantics<parallel>], iteration_bounds = array<i64: 1>, scalar_prefetch = 0 : i64, scratch_operands = 0 : i64, tpu.core_type = #tpu.core_type<tc>, window_params = [{transform_indices = @transform_0, window_bounds = array<i64: 1, 1>}, {transform_indices = @transform_1, window_bounds = array<i64: 4, 64>}, {pipeline_mode = #tpu.pipeline_mode<synchronous>, transform_indices = @transform_2, window_bounds = array<i64: 64, 256>}, {pipeline_mode = #tpu.pipeline_mode<synchronous>, transform_indices = @transform_3, window_bounds = array<i64: 1, 128>}, {pipeline_mode = #tpu.pipeline_mode<synchronous>, transform_indices = @transform_4, window_bounds = array<i64: 128, 128>}, {pipeline_mode = #tpu.pipeline_mode<synchronous>, transform_indices = @transform_5, window_bounds = array<i64: 1, 128>}, {pipeline_mode = #tpu.pipeline_mode<synchronous>, transform_indices = @transform_6, window_bounds = array<i64: 128, 128>}, {pipeline_mode = #tpu.pipeline_mode<synchronous>, transform_indices = @transform_7, window_bounds = array<i64: 1, 128>}, {transform_indices = @transform_8, window_bounds = array<i64: 4, 128>}]} {
    %c0 = arith.constant 0 : index
    %c0_0 = arith.constant 0 : index
    %0 = memref.load %arg1[%c0, %c0_0] : memref<1x1xf32, #tpu.memory_space<smem>>
    %c0_1 = arith.constant 0 : index
    %c0_2 = arith.constant 0 : index
    %1 = vector.load %arg2[%c0_1, %c0_2] : memref<4x64xf32, #tpu.memory_space<vmem>>, vector<4x64xf32>
    %2 = arith.truncf %1 : vector<4x64xf32> to vector<4x64xbf16>
    %c0_3 = arith.constant 0 : index
    %c0_4 = arith.constant 0 : index
    %3 = vector.load %arg3[%c0_3, %c0_4] : memref<64x256xbf16, #tpu.memory_space<vmem>>, vector<64x256xbf16>
    %cst = arith.constant dense<0.000000e+00> : vector<4x256xf32>
    %4 = tpu.matmul %2, %3, %cst {dimension_numbers = #tpu.dot_dimension_numbers<[1], [0], [0], [1], [0, 0, 1, 1], [], []>} : vector<4x64xbf16>, vector<64x256xbf16>, vector<4x256xf32> -> vector<4x256xf32>
    %5 = vector.extract_strided_slice %4 {offsets = [0, 0], sizes = [4, 128], strides = [1, 1]} : vector<4x256xf32> to vector<4x128xf32>
    %c0_5 = arith.constant 0 : index
    %c0_6 = arith.constant 0 : index
    %6 = vector.load %arg4[%c0_5, %c0_6] : memref<1x128xf32, #tpu.memory_space<vmem>>, vector<1x128xf32>
    %7 = vector.broadcast %6 : vector<1x128xf32> to vector<4x128xf32>
    %8 = arith.addf %5, %7 : vector<4x128xf32>
    %cst_7 = arith.constant 0.000000e+00 : f32
    %9 = vector.broadcast %cst_7 : f32 to vector<4x128xf32>
    %10 = arith.cmpf ogt, %8, %9 : vector<4x128xf32>
    %11 = vector.broadcast %0 : f32 to vector<4x128xf32>
    %12 = arith.mulf %11, %8 : vector<4x128xf32>
    %13 = arith.select %10, %8, %12 : vector<4x128xi1>, vector<4x128xf32>
    %14 = vector.extract_strided_slice %4 {offsets = [0, 128], sizes = [4, 128], strides = [1, 1]} : vector<4x256xf32> to vector<4x128xf32>
    %15 = arith.truncf %13 : vector<4x128xf32> to vector<4x128xbf16>
    %c0_8 = arith.constant 0 : index
    %c0_9 = arith.constant 0 : index
    %16 = vector.load %arg5[%c0_8, %c0_9] : memref<128x128xbf16, #tpu.memory_space<vmem>>, vector<128x128xbf16>
    %cst_10 = arith.constant dense<0.000000e+00> : vector<4x128xf32>
    %17 = tpu.matmul %15, %16, %cst_10 {dimension_numbers = #tpu.dot_dimension_numbers<[1], [0], [0], [1], [0, 0, 1, 1], [], []>} : vector<4x128xbf16>, vector<128x128xbf16>, vector<4x128xf32> -> vector<4x128xf32>
    %c0_11 = arith.constant 0 : index
    %c0_12 = arith.constant 0 : index
    %18 = vector.load %arg6[%c0_11, %c0_12] : memref<1x128xf32, #tpu.memory_space<vmem>>, vector<1x128xf32>
    %19 = vector.broadcast %18 : vector<1x128xf32> to vector<4x128xf32>
    %20 = arith.addf %17, %19 : vector<4x128xf32>
    %cst_13 = arith.constant 0.000000e+00 : f32
    %21 = vector.broadcast %cst_13 : f32 to vector<4x128xf32>
    %22 = arith.cmpf ogt, %20, %21 : vector<4x128xf32>
    %23 = vector.broadcast %0 : f32 to vector<4x128xf32>
    %24 = arith.mulf %23, %20 : vector<4x128xf32>
    %25 = arith.select %22, %20, %24 : vector<4x128xi1>, vector<4x128xf32>
    %26 = arith.truncf %25 : vector<4x128xf32> to vector<4x128xbf16>
    %c0_14 = arith.constant 0 : index
    %c0_15 = arith.constant 0 : index
    %27 = vector.load %arg7[%c0_14, %c0_15] : memref<128x128xbf16, #tpu.memory_space<vmem>>, vector<128x128xbf16>
    %cst_16 = arith.constant dense<0.000000e+00> : vector<4x128xf32>
    %28 = tpu.matmul %26, %27, %cst_16 {dimension_numbers = #tpu.dot_dimension_numbers<[1], [0], [0], [1], [0, 0, 1, 1], [], []>} : vector<4x128xbf16>, vector<128x128xbf16>, vector<4x128xf32> -> vector<4x128xf32>
    %29 = arith.addf %28, %14 : vector<4x128xf32>
    %c0_17 = arith.constant 0 : index
    %c0_18 = arith.constant 0 : index
    %30 = vector.load %arg8[%c0_17, %c0_18] : memref<1x128xf32, #tpu.memory_space<vmem>>, vector<1x128xf32>
    %31 = vector.broadcast %30 : vector<1x128xf32> to vector<4x128xf32>
    %32 = arith.addf %29, %31 : vector<4x128xf32>
    %c0_19 = arith.constant 0 : index
    %c0_20 = arith.constant 0 : index
    %33 = vector.load %arg9[%c0_19, %c0_20] : memref<4x128xf32, #tpu.memory_space<vmem>>, vector<4x128xf32>
    tpu.vector_store %arg9[%c0_19, %c0_20], %32 {strides = array<i32>} : memref<4x128xf32, #tpu.memory_space<vmem>>, vector<4x128xf32>,
    return
  }
  func.func @transform_0(%arg0: i32) -> (i32, i32) {
    %c0_i32 = arith.constant 0 : i32
    %c0_i32_0 = arith.constant 0 : i32
    %c0_i32_1 = arith.constant 0 : i32
    return %c0_i32, %c0_i32_0 : i32, i32
  }
  func.func @transform_1(%arg0: i32) -> (i32, i32) {
    %c0_i32 = arith.constant 0 : i32
    %c0_i32_0 = arith.constant 0 : i32
    return %arg0, %c0_i32 : i32, i32
  }
  func.func @transform_2(%arg0: i32) -> (i32, i32) {
    %c0_i32 = arith.constant 0 : i32
    %c0_i32_0 = arith.constant 0 : i32
    %c0_i32_1 = arith.constant 0 : i32
    return %c0_i32, %c0_i32_0 : i32, i32
  }
  func.func @transform_3(%arg0: i32) -> (i32, i32) {
    %c0_i32 = arith.constant 0 : i32
    %c0_i32_0 = arith.constant 0 : i32
    %c0_i32_1 = arith.constant 0 : i32
    return %c0_i32, %c0_i32_0 : i32, i32
  }
  func.func @transform_4(%arg0: i32) -> (i32, i32) {
    %c0_i32 = arith.constant 0 : i32
    %c0_i32_0 = arith.constant 0 : i32
    %c0_i32_1 = arith.constant 0 : i32
    return %c0_i32, %c0_i32_0 : i32, i32
  }
  func.func @transform_5(%arg0: i32) -> (i32, i32) {
    %c0_i32 = arith.constant 0 : i32
    %c0_i32_0 = arith.constant 0 : i32
    %c0_i32_1 = arith.constant 0 : i32
    return %c0_i32, %c0_i32_0 : i32, i32
  }
  func.func @transform_6(%arg0: i32) -> (i32, i32) {
    %c0_i32 = arith.constant 0 : i32
    %c0_i32_0 = arith.constant 0 : i32
    %c0_i32_1 = arith.constant 0 : i32
    return %c0_i32, %c0_i32_0 : i32, i32
  }
  func.func @transform_7(%arg0: i32) -> (i32, i32) {
    %c0_i32 = arith.constant 0 : i32
    %c0_i32_0 = arith.constant 0 : i32
    %c0_i32_1 = arith.constant 0 : i32
    return %c0_i32, %c0_i32_0 : i32, i32
  }
  func.func @transform_8(%arg0: i32) -> (i32, i32) {
    %c0_i32 = arith.constant 0 : i32
    %c0_i32_0 = arith.constant 0 : i32
    return %arg0, %c0_i32 : i32, i32
  }
}

</mosaic_0001>

<llo_original>
// kernel: tpu_custom_call.1
$region0: #{tpu_custom_call.1}
  #allocation0 [shape = 'u32[]', space=smem, size = 0x4, offset = 0x4, fixed_abs, tag = 'smem constant byte address 0x4 - core index']
  #allocation1 [shape = 'u32[144,128]{1,0:T(1,128)}', space=vmem, size = 0x12000, scoped, tag = 'internal scratch']
  #allocation2 [shape = 'f32[1,1]{1,0:T(1,128)S(6)}', space=smem, size = 0x200, scoped, tag = 'scoped memory for tpu_custom_call.1']
  %s0 = inlined_call_operand.<no memory space> [shape: f32[1,1], index: 0, kind: input, shape index: {}]
  %s1 = inlined_call_operand.hbm [shape: f32[4,64], index: 1, kind: input, shape index: {}]
  %s2 = inlined_call_operand.hbm [shape: bf16[64,256], index: 2, kind: input, shape index: {}]
  %s3 = inlined_call_operand.vmem [shape: f32[1,128], index: 3, kind: input, shape index: {}]
  %s4 = inlined_call_operand.hbm [shape: bf16[128,128], index: 4, kind: input, shape index: {}]
  %s5 = inlined_call_operand.vmem [shape: f32[1,128], index: 5, kind: input, shape index: {}]
  %s6 = inlined_call_operand.hbm [shape: bf16[128,128], index: 6, kind: input, shape index: {}]
  %s7 = inlined_call_operand.vmem [shape: f32[1,128], index: 7, kind: input, shape index: {}]
  %s8 = inlined_call_operand.hbm [shape: f32[4,128], index: 8, kind: output, shape index: {}]
  %s9 = sld [smem:[#allocation0]]
  $region58: #{tpu_custom_call.1} parent=0
    _
  %s11 = ssub.s32 1, %s9
  %s12 = scalar_select 0, %s11, %s9
  %13 = sst [smem:[#allocation2]] %s0
  $region1: #{tpu_custom_call.1} parent=0
    #allocation3 [shape = 'u8[2048]{0}', space=vmem, size = 0x800, scoped, tag = 'input window, operand 1, single buffered']
    #allocation4 [shape = 's32[1]{0}', space=sflag, size = 0x4, scoped, tag = 'scoped memory for tpu_custom_call.1']
    #allocation5 [shape = 's32[1]{0}', space=sflag, size = 0x4, scoped, tag = 'scoped memory for tpu_custom_call.1']
    #allocation6 [shape = 'u8[32768]{0}', space=vmem, size = 0x8000, scoped, tag = 'input window, operand 2, single buffered']
    #allocation7 [shape = 's32[1]{0}', space=sflag, size = 0x4, scoped, tag = 'scoped memory for tpu_custom_call.1']
    #allocation8 [shape = 'u8[32768]{0}', space=vmem, size = 0x8000, scoped, tag = 'input window, operand 4, single buffered']
    #allocation9 [shape = 'u8[32768]{0}', space=vmem, size = 0x8000, scoped, tag = 'input window, operand 6, single buffered']
    #allocation10 [shape = 's32[1]{0}', space=sflag, size = 0x4, scoped, tag = 'scoped memory for tpu_custom_call.1']
    #allocation11 [shape = 'u8[2048]{0}', space=vmem, size = 0x800, scoped, tag = 'output window, operand 0, single buffered']
    %14 = vsyncpa [#allocation4], 0
    %15 = vsyncpa [#allocation7], 0
    %16 = vsyncpa [#allocation10], 0
    %17 = vsyncpa [#allocation5], 0
    // Predicated region
    $region2: #{tpu_custom_call.1} parent=1 // pred_check
      _
    $region3: #{tpu_custom_call.1} parent=1 // pred_check_branch
      %19 = sbr.rel (0) target = $region5
    $region4: #{tpu_custom_call.1} parent=1 // pred_region
      _
    $region5: #{tpu_custom_call.1} parent=1 // pred_fallthru
      _
    // Predicated region
    $region6: #{tpu_custom_call.1} parent=1 // pred_check
      _
    $region7: #{tpu_custom_call.1} parent=1 // pred_check_branch
      %21 = sbr.rel (0) target = $region9
    $region8: #{tpu_custom_call.1} parent=1 // pred_region
      %s23 = ssub.s32 64, 64
      %24 = vsyncadd [#allocation4], %s23
      %s26 = sshll.u32 [#allocation3], 4
      %s27 = int_to_ptr.vmem [resolvable:$true] %s26
      %29 = dma.hbm_to_vmem [thread:$0]  %s1, 64, %s27, [#allocation4]
    $region9: #{tpu_custom_call.1} parent=1 // pred_fallthru
      _
    // Predicated region
    $region10: #{tpu_custom_call.1} parent=1 // pred_check
      _
    $region11: #{tpu_custom_call.1} parent=1 // pred_check_branch
      %31 = sbr.rel (0) target = $region13
    $region12: #{tpu_custom_call.1} parent=1 // pred_region
      %s33 = ssub.s32 1024, 1024
      %34 = vsyncadd [#allocation7], %s33
      %s35 = sshll.u32 [#allocation6], 4
      %s36 = int_to_ptr.vmem [resolvable:$true] %s35
      %41 = dma.hbm_to_vmem [thread:$0]  %s2, 1024, %s36, [#allocation7], 128, 128, 8
    $region13: #{tpu_custom_call.1} parent=1 // pred_fallthru
      _
    // Predicated region
    $region14: #{tpu_custom_call.1} parent=1 // pred_check
      _
    $region15: #{tpu_custom_call.1} parent=1 // pred_check_branch
      %43 = sbr.rel (0) target = $region17
    $region16: #{tpu_custom_call.1} parent=1 // pred_region
      _
    $region17: #{tpu_custom_call.1} parent=1 // pred_fallthru
      _
    // Predicated region
    $region18: #{tpu_custom_call.1} parent=1 // pred_check
      _
    $region19: #{tpu_custom_call.1} parent=1 // pred_check_branch
      %45 = sbr.rel (0) target = $region21
    $region20: #{tpu_custom_call.1} parent=1 // pred_region
      %s47 = ssub.s32 1024, 1024
      %48 = vsyncadd [#allocation7], %s47
      %s49 = sshll.u32 [#allocation8], 4
      %s50 = int_to_ptr.vmem [resolvable:$true] %s49
      %55 = dma.hbm_to_vmem [thread:$0]  %s4, 1024, %s50, [#allocation7], 64, 64, 4
    $region21: #{tpu_custom_call.1} parent=1 // pred_fallthru
      _
    // Predicated region
    $region22: #{tpu_custom_call.1} parent=1 // pred_check
      _
    $region23: #{tpu_custom_call.1} parent=1 // pred_check_branch
      %57 = sbr.rel (0) target = $region25
    $region24: #{tpu_custom_call.1} parent=1 // pred_region
      _
    $region25: #{tpu_custom_call.1} parent=1 // pred_fallthru
      _
    // Predicated region
    $region26: #{tpu_custom_call.1} parent=1 // pred_check
      _
    $region27: #{tpu_custom_call.1} parent=1 // pred_check_branch
      %59 = sbr.rel (0) target = $region29
    $region28: #{tpu_custom_call.1} parent=1 // pred_region
      %s61 = ssub.s32 1024, 1024
      %62 = vsyncadd [#allocation10], %s61
      %s63 = sshll.u32 [#allocation9], 4
      %s64 = int_to_ptr.vmem [resolvable:$true] %s63
      %69 = dma.hbm_to_vmem [thread:$0]  %s6, 1024, %s64, [#allocation10], 64, 64, 4
    $region29: #{tpu_custom_call.1} parent=1 // pred_fallthru
      _
    // Predicated region
    $region30: #{tpu_custom_call.1} parent=1 // pred_check
      _
    $region31: #{tpu_custom_call.1} parent=1 // pred_check_branch
      %71 = sbr.rel (0) target = $region33
    $region32: #{tpu_custom_call.1} parent=1 // pred_region
      _
    $region33: #{tpu_custom_call.1} parent=1 // pred_fallthru
      _
    // Predicated region
    $region34: #{tpu_custom_call.1} parent=1 // pred_check
      _
    $region35: #{tpu_custom_call.1} parent=1 // pred_check_branch
      %73 = sbr.rel (0) target = $region37
    $region36: #{tpu_custom_call.1} parent=1 // pred_region
      %74 = dma.done [#allocation4], 64
    $region37: #{tpu_custom_call.1} parent=1 // pred_fallthru
      _
    // Predicated region
    $region38: #{tpu_custom_call.1} parent=1 // pred_check
      _
    $region39: #{tpu_custom_call.1} parent=1 // pred_check_branch
      %76 = sbr.rel (0) target = $region41
    $region40: #{tpu_custom_call.1} parent=1 // pred_region
      %77 = dma.done [#allocation7], 1024
    $region41: #{tpu_custom_call.1} parent=1 // pred_fallthru
      _
    // Predicated region
    $region42: #{tpu_custom_call.1} parent=1 // pred_check
      _
    $region43: #{tpu_custom_call.1} parent=1 // pred_check_branch
      %79 = sbr.rel (0) target = $region45
    $region44: #{tpu_custom_call.1} parent=1 // pred_region
      %80 = dma.done [#allocation7], 1024
    $region45: #{tpu_custom_call.1} parent=1 // pred_fallthru
      _
    // Predicated region
    $region46: #{tpu_custom_call.1} parent=1 // pred_check
      _
    $region47: #{tpu_custom_call.1} parent=1 // pred_check_branch
      %82 = sbr.rel (0) target = $region49
    $region48: #{tpu_custom_call.1} parent=1 // pred_region
      %83 = dma.done [#allocation10], 1024
    $region49: #{tpu_custom_call.1} parent=1 // pred_fallthru
      _
    %s85 = sld [smem:[#allocation2]]
    %v86 = vld [vmem:[#allocation3] sm:$0xf]
    %v87 = vpack.c.bf16 %v86, %v86
    %v88 = vld [vmem:[#allocation6] sm:$0xff]
    %v89 = vld [vmem:[#allocation6 + $0x8] sm:$0xff]
    %v90 = vld [vmem:[#allocation6 + $0x10] sm:$0xff]
    %v91 = vld [vmem:[#allocation6 + $0x18] sm:$0xff]
    %v92 = vld [vmem:[#allocation6 + $0x20] sm:$0xff]
    %v93 = vld [vmem:[#allocation6 + $0x28] sm:$0xff]
    %v94 = vld [vmem:[#allocation6 + $0x30] sm:$0xff]
    %v95 = vld [vmem:[#allocation6 + $0x38] sm:$0xff]
    %v104 = vunpack.c.l.b16 %v88
    %v105 = vunpack.c.h.b16 %v88
    %v106 = vunpack.c.l.b16 %v89
    %v107 = vunpack.c.h.b16 %v89
    %v108 = vunpack.c.l.b16 %v90
    %v109 = vunpack.c.h.b16 %v90
    %v110 = vunpack.c.l.b16 %v91
    %v111 = vunpack.c.h.b16 %v91
    %v112 = vunpack.c.l.b16 %v92
    %v113 = vunpack.c.h.b16 %v92
    %v114 = vunpack.c.l.b16 %v93
    %v115 = vunpack.c.h.b16 %v93
    %v116 = vunpack.c.l.b16 %v94
    %v117 = vunpack.c.h.b16 %v94
    %v118 = vunpack.c.l.b16 %v95
    %v119 = vunpack.c.h.b16 %v95
    %v120 = vpack.c.b16 %v106, %v104
    %v121 = vpack.c.b16 %v107, %v105
    %v122 = vpack.c.b16 %v110, %v108
    %v123 = vpack.c.b16 %v111, %v109
    %v124 = vpack.c.b16 %v114, %v112
    %v125 = vpack.c.b16 %v115, %v113
    %v126 = vpack.c.b16 %v118, %v116
    %v127 = vpack.c.b16 %v119, %v117
    %vm136 = vcmask 523264
    %v138 = vsel %vm136, %v87, 0
    %140 = vmatprep.subr.bf16.mxu0 %v121
    %141 = vmatpush1.bf16.msra.mxu0 %v120
    %142 = vmatprep.subr.bf16.mxu0 %v123
    %143 = vmatpush1.bf16.msra.mxu0 %v122
    %144 = vmatprep.subr.bf16.mxu0 %v125
    %145 = vmatpush1.bf16.msra.mxu0 %v124
    %146 = vmatprep.subr.bf16.mxu0 %v127
    %147 = vmatpush1.bf16.msra.mxu0 %v126
    %148 = vmatprep.subr.bf16.mxu0 0
    %149 = vmatpush1.bf16.msra.mxu0 0
    %150 = vmatprep.subr.bf16.mxu0 0
    %151 = vmatpush1.bf16.msra.mxu0 0
    %152 = vmatprep.subr.bf16.mxu0 0
    %153 = vmatpush1.bf16.msra.mxu0 0
    %154 = vmatprep.subr.bf16.mxu0 0
    %155 = vmatpush1.bf16.msra.mxu0 0
    %156 = vmatprep.subr.bf16.mxu0 0
    %157 = vmatpush1.bf16.msra.mxu0 0
    %158 = vmatprep.subr.bf16.mxu0 0
    %159 = vmatpush1.bf16.msra.mxu0 0
    %160 = vmatprep.subr.bf16.mxu0 0
    %161 = vmatpush1.bf16.msra.mxu0 0
    %162 = vmatprep.subr.bf16.mxu0 0
    %163 = vmatpush1.bf16.msra.mxu0 0
    %164 = vmatprep.subr.bf16.mxu0 0
    %165 = vmatpush1.bf16.msra.mxu0 0
    %166 = vmatprep.subr.bf16.mxu0 0
    %167 = vmatpush1.bf16.msra.mxu0 0
    %168 = vmatprep.subr.bf16.mxu0 0
    %169 = vmatpush1.bf16.msra.mxu0 0
    %170 = vmatprep.subr.bf16.mxu0 0
    %171 = vmatpush1.bf16.msra.mxu0 0
    %172 = vmatprep.mubr.bf16.mxu0 0
    %173 = vmatmul.mubr.bf16.gmra.mrb[0].mxu0 %v138
    %v174 = vpop.f32.mrb[0].mxu0
    %v175 = vadd.f32 0.0, %v174
    %v176 = vpop.f32.mrb[0].mxu0
    %v177 = vadd.f32 0.0, %v176
    %v178 = vpop.f32.mrb[0].mxu0
    %v179 = vpop.f32.mrb[0].mxu0
    %180 = vdwg.mxu0
    %v181 = vld [vmem:[%s3] sm:$0x1]
    %v183 = vlaneseq
    %v184 = vshrl.u32 %v183, 7
    %v185 = vsub.s32 0, %v184
    %v186 = vrot.slane %v181, %v185
    %v188 = vadd.f32 %v175, %v186
    %vm189 = vcmp.gt.f32.partialorder %v188, 0.0
    %v190 = vstv %s85
    %v191 = vmul.f32 %v190, %v188
    %v192 = vsel %vm189, %v188, %v191
    %v193 = vpack.c.bf16 %v192, %v192
    %v194 = vld [vmem:[#allocation8] sm:$0xf]
    %v195 = vld [vmem:[#allocation8 + $0x4] sm:$0xf]
    %v196 = vld [vmem:[#allocation8 + $0x8] sm:$0xf]
    %v197 = vld [vmem:[#allocation8 + $0xc] sm:$0xf]
    %v198 = vld [vmem:[#allocation8 + $0x10] sm:$0xf]
    %v199 = vld [vmem:[#allocation8 + $0x14] sm:$0xf]
    %v200 = vld [vmem:[#allocation8 + $0x18] sm:$0xf]
    %v201 = vld [vmem:[#allocation8 + $0x1c] sm:$0xf]
    %v202 = vld [vmem:[#allocation8 + $0x20] sm:$0xf]
    %v203 = vld [vmem:[#allocation8 + $0x24] sm:$0xf]
    %v204 = vld [vmem:[#allocation8 + $0x28] sm:$0xf]
    %v205 = vld [vmem:[#allocation8 + $0x2c] sm:$0xf]
    %v206 = vld [vmem:[#allocation8 + $0x30] sm:$0xf]
    %v207 = vld [vmem:[#allocation8 + $0x34] sm:$0xf]
    %v208 = vld [vmem:[#allocation8 + $0x38] sm:$0xf]
    %v209 = vld [vmem:[#allocation8 + $0x3c] sm:$0xf]
    %v210 = vld [vmem:[%s5] sm:$0x1]
    %v212 = vlaneseq
    %v213 = vshrl.u32 %v212, 7
    %v214 = vsub.s32 0, %v213
    %v215 = vrot.slane %v210, %v214
    %v233 = vunpack.c.l.b16 %v194
    %v234 = vunpack.c.l.b16 %v195
    %v235 = vunpack.c.l.b16 %v196
    %v236 = vunpack.c.l.b16 %v197
    %v237 = vunpack.c.l.b16 %v198
    %v238 = vunpack.c.l.b16 %v199
    %v239 = vunpack.c.l.b16 %v200
    %v240 = vunpack.c.l.b16 %v201
    %v241 = vunpack.c.l.b16 %v202
    %v242 = vunpack.c.l.b16 %v203
    %v243 = vunpack.c.l.b16 %v204
    %v244 = vunpack.c.l.b16 %v205
    %v245 = vunpack.c.l.b16 %v206
    %v246 = vunpack.c.l.b16 %v207
    %v247 = vunpack.c.l.b16 %v208
    %v248 = vunpack.c.l.b16 %v209
    %v249 = vpack.c.b16 %v234, %v233
    %v250 = vpack.c.b16 %v236, %v235
    %v251 = vpack.c.b16 %v238, %v237
    %v252 = vpack.c.b16 %v240, %v239
    %v253 = vpack.c.b16 %v242, %v241
    %v254 = vpack.c.b16 %v244, %v243
    %v255 = vpack.c.b16 %v246, %v245
    %v256 = vpack.c.b16 %v248, %v247
    %265 = vmatprep.subr.bf16.mxu0 0
    %266 = vmatpush1.bf16.msra.mxu0 %v249
    %267 = vmatprep.subr.bf16.mxu0 0
    %268 = vmatpush1.bf16.msra.mxu0 %v250
    %269 = vmatprep.subr.bf16.mxu0 0
    %270 = vmatpush1.bf16.msra.mxu0 %v251
    %271 = vmatprep.subr.bf16.mxu0 0
    %272 = vmatpush1.bf16.msra.mxu0 %v252
    %273 = vmatprep.subr.bf16.mxu0 0
    %274 = vmatpush1.bf16.msra.mxu0 %v253
    %275 = vmatprep.subr.bf16.mxu0 0
    %276 = vmatpush1.bf16.msra.mxu0 %v254
    %277 = vmatprep.subr.bf16.mxu0 0
    %278 = vmatpush1.bf16.msra.mxu0 %v255
    %279 = vmatprep.subr.bf16.mxu0 0
    %280 = vmatpush1.bf16.msra.mxu0 %v256
    %281 = vmatprep.subr.bf16.mxu0 0
    %282 = vmatpush1.bf16.msra.mxu0 0
    %283 = vmatprep.subr.bf16.mxu0 0
    %284 = vmatpush1.bf16.msra.mxu0 0
    %285 = vmatprep.subr.bf16.mxu0 0
    %286 = vmatpush1.bf16.msra.mxu0 0
    %287 = vmatprep.subr.bf16.mxu0 0
    %288 = vmatpush1.bf16.msra.mxu0 0
    %289 = vmatprep.subr.bf16.mxu0 0
    %290 = vmatpush1.bf16.msra.mxu0 0
    %291 = vmatprep.subr.bf16.mxu0 0
    %292 = vmatpush1.bf16.msra.mxu0 0
    %293 = vmatprep.subr.bf16.mxu0 0
    %294 = vmatpush1.bf16.msra.mxu0 0
    %295 = vmatprep.subr.bf16.mxu0 0
    %296 = vmatpush1.bf16.msra.mxu0 0
    %297 = vmatprep.mubr.bf16.mxu0 0
    %298 = vmatmul.mubr.bf16.gmra.mrb[0].mxu0 %v193
    %v299 = vpop.f32.mrb[0].mxu0
    %v300 = vadd.f32 %v215, %v299
    %v301 = vpop.f32.mrb[0].mxu0
    %v302 = vpop.f32.mrb[0].mxu0
    %v303 = vpop.f32.mrb[0].mxu0
    %304 = vdwg.mxu0
    %vm305 = vcmp.gt.f32.partialorder %v300, 0.0
    %v306 = vmul.f32 %v190, %v300
    %v307 = vsel %vm305, %v300, %v306
    %v308 = vpack.c.bf16 %v307, %v307
    %v309 = vld [vmem:[#allocation9] sm:$0xf]
    %v310 = vld [vmem:[#allocation9 + $0x4] sm:$0xf]
    %v311 = vld [vmem:[#allocation9 + $0x8] sm:$0xf]
    %v312 = vld [vmem:[#allocation9 + $0xc] sm:$0xf]
    %v313 = vld [vmem:[#allocation9 + $0x10] sm:$0xf]
    %v314 = vld [vmem:[#allocation9 + $0x14] sm:$0xf]
    %v315 = vld [vmem:[#allocation9 + $0x18] sm:$0xf]
    %v316 = vld [vmem:[#allocation9 + $0x1c] sm:$0xf]
    %v317 = vld [vmem:[#allocation9 + $0x20] sm:$0xf]
    %v318 = vld [vmem:[#allocation9 + $0x24] sm:$0xf]
    %v319 = vld [vmem:[#allocation9 + $0x28] sm:$0xf]
    %v320 = vld [vmem:[#allocation9 + $0x2c] sm:$0xf]
    %v321 = vld [vmem:[#allocation9 + $0x30] sm:$0xf]
    %v322 = vld [vmem:[#allocation9 + $0x34] sm:$0xf]
    %v323 = vld [vmem:[#allocation9 + $0x38] sm:$0xf]
    %v324 = vld [vmem:[#allocation9 + $0x3c] sm:$0xf]
    %v341 = vunpack.c.l.b16 %v309
    %v342 = vunpack.c.l.b16 %v310
    %v343 = vunpack.c.l.b16 %v311
    %v344 = vunpack.c.l.b16 %v312
    %v345 = vunpack.c.l.b16 %v313
    %v346 = vunpack.c.l.b16 %v314
    %v347 = vunpack.c.l.b16 %v315
    %v348 = vunpack.c.l.b16 %v316
    %v349 = vunpack.c.l.b16 %v317
    %v350 = vunpack.c.l.b16 %v318
    %v351 = vunpack.c.l.b16 %v319
    %v352 = vunpack.c.l.b16 %v320
    %v353 = vunpack.c.l.b16 %v321
    %v354 = vunpack.c.l.b16 %v322
    %v355 = vunpack.c.l.b16 %v323
    %v356 = vunpack.c.l.b16 %v324
    %v357 = vpack.c.b16 %v342, %v341
    %v358 = vpack.c.b16 %v344, %v343
    %v359 = vpack.c.b16 %v346, %v345
    %v360 = vpack.c.b16 %v348, %v347
    %v361 = vpack.c.b16 %v350, %v349
    %v362 = vpack.c.b16 %v352, %v351
    %v363 = vpack.c.b16 %v354, %v353
    %v364 = vpack.c.b16 %v356, %v355
    %373 = vmatprep.subr.bf16.mxu0 0
    %374 = vmatpush1.bf16.msra.mxu0 %v357
    %375 = vmatprep.subr.bf16.mxu0 0
    %376 = vmatpush1.bf16.msra.mxu0 %v358
    %377 = vmatprep.subr.bf16.mxu0 0
    %378 = vmatpush1.bf16.msra.mxu0 %v359
    %379 = vmatprep.subr.bf16.mxu0 0
    %380 = vmatpush1.bf16.msra.mxu0 %v360
    %381 = vmatprep.subr.bf16.mxu0 0
    %382 = vmatpush1.bf16.msra.mxu0 %v361
    %383 = vmatprep.subr.bf16.mxu0 0
    %384 = vmatpush1.bf16.msra.mxu0 %v362
    %385 = vmatprep.subr.bf16.mxu0 0
    %386 = vmatpush1.bf16.msra.mxu0 %v363
    %387 = vmatprep.subr.bf16.mxu0 0
    %388 = vmatpush1.bf16.msra.mxu0 %v364
    %389 = vmatprep.subr.bf16.mxu0 0
    %390 = vmatpush1.bf16.msra.mxu0 0
    %391 = vmatprep.subr.bf16.mxu0 0
    %392 = vmatpush1.bf16.msra.mxu0 0
    %393 = vmatprep.subr.bf16.mxu0 0
    %394 = vmatpush1.bf16.msra.mxu0 0
    %395 = vmatprep.subr.bf16.mxu0 0
    %396 = vmatpush1.bf16.msra.mxu0 0
    %397 = vmatprep.subr.bf16.mxu0 0
    %398 = vmatpush1.bf16.msra.mxu0 0
    %399 = vmatprep.subr.bf16.mxu0 0
    %400 = vmatpush1.bf16.msra.mxu0 0
    %401 = vmatprep.subr.bf16.mxu0 0
    %402 = vmatpush1.bf16.msra.mxu0 0
    %403 = vmatprep.subr.bf16.mxu0 0
    %404 = vmatpush1.bf16.msra.mxu0 0
    %405 = vmatprep.mubr.bf16.mxu0 0
    %406 = vmatmul.mubr.bf16.gmra.mrb[0].mxu0 %v308
    %v407 = vpop.f32.mrb[0].mxu0
    %v408 = vadd.f32 %v177, %v407
    %v409 = vpop.f32.mrb[0].mxu0
    %v410 = vpop.f32.mrb[0].mxu0
    %v411 = vpop.f32.mrb[0].mxu0
    %412 = vdwg.mxu0
    %v413 = vld [vmem:[%s7] sm:$0x1]
    %v415 = vlaneseq
    %v416 = vshrl.u32 %v415, 7
    %v417 = vsub.s32 0, %v416
    %v418 = vrot.slane %v413, %v417
    %v420 = vadd.f32 %v408, %v418
    %421 = vst [vmem:[#allocation11] sm:$0xf] %v420
    // Predicated region
    $region50: #{tpu_custom_call.1} parent=1 // pred_check
      _
    $region51: #{tpu_custom_call.1} parent=1 // pred_check_branch
      %423 = sbr.rel (0) target = $region53
    $region52: #{tpu_custom_call.1} parent=1 // pred_region
      %s425 = ssub.s32 64, 64
      %426 = vsyncadd [#allocation5], %s425
      %s428 = sshll.u32 [#allocation11], 4
      %s429 = int_to_ptr.vmem [resolvable:$true] %s428
      %431 = dma.vmem_to_hbm [thread:$0]  %s429, 64, %s8, [#allocation5]
    $region53: #{tpu_custom_call.1} parent=1 // pred_fallthru
      _
    // Predicated region
    $region54: #{tpu_custom_call.1} parent=1 // pred_check
      _
    $region55: #{tpu_custom_call.1} parent=1 // pred_check_branch
      %433 = sbr.rel (0) target = $region57
    $region56: #{tpu_custom_call.1} parent=1 // pred_region
      %434 = dma.done [#allocation5], 64
    $region57: #{tpu_custom_call.1} parent=1 // pred_fallthru
      _
    %435 = vsyncpa [#allocation4], 1
    %436 = vsyncpa [#allocation7], 1
    %437 = vsyncpa [#allocation10], 1
    %438 = vsyncpa [#allocation5], 1

</llo_original>
